<compile_context>
chip_gen: v5e
topology: v5e:2x2
jax: 0.10.0
libtpu: 0.0.40
codegen_flags: <defaults>
</compile_context>

<pallas_src>
import functools

import jax
import jax.numpy as jnp
from jax.experimental import pallas as pl
from jax.experimental.pallas import tpu as pltpu


_TARGET_BLOCK_BYTES = 4 << 20          # in + out bytes per block (pre double-buffer)
_VMEM_LIMIT_BYTES = 32 * 1024 * 1024   # explicit scoped-VMEM limit (safe on v5e/v6e/v7x)


# ---------------------------------------------------------------------------
# Channel-block picker
# ---------------------------------------------------------------------------
def _pick_channel_block(C, samp_num, hw, itemsize, target_bytes=_TARGET_BLOCK_BYTES):
    """Channels per block for a (samp_num, C_block, H*W) block.

    The second-to-last block dim must be a multiple of the sublane tile
    (8 for 4-byte dtypes, 16 for 2-byte dtypes) or equal the full C.
    Budget counts input + output bytes of one block.
    """
    sub = 8 if itemsize >= 4 else 16
    if C % sub != 0:
        # Full channel axis in one block (exempt from the sublane-multiple rule).
        # Fine for typical CNN feature maps; very large C*H*W would need a
        # different split.
        return C
    per_c = samp_num * hw * itemsize * 2        # input + output bytes per channel row
    cb = (target_bytes // max(per_c, 1)) // sub * sub
    return int(max(sub, min(cb, C)))


# ---------------------------------------------------------------------------
# Fused kernel: per-(b, c) mean/std over H*W, group-local permuted stat mix,
# and the affine re-style  out = x * scale + bias, all in one pass.
# ---------------------------------------------------------------------------
def _mixstyle_kernel(perm_ref, lmda_ref, x_ref, o_ref, *, eps, samp_num):
    g = pl.program_id(0)                 # batch-group index
    base = g * samp_num
    hw = x_ref.shape[-1]
    inv_n = 1.0 / hw
    inv_nm1 = 1.0 / max(hw - 1, 1)       # torch .var() is unbiased (ddof=1)

    # Pass 1 (VMEM-resident): per-(b, c) mu / sigma in f32.  Processing one
    # batch row at a time keeps f32 temporaries to 1/samp_num of the block.
    mus, sigs = [], []
    for b in range(samp_num):
        xb = x_ref[b].astype(jnp.float32)                      # (Cb, HW)
        mu = jnp.sum(xb, axis=-1, keepdims=True) * inv_n       # (Cb, 1)
        d = xb - mu
        var = jnp.sum(d * d, axis=-1, keepdims=True) * inv_nm1
        mus.append(mu)
        sigs.append(jnp.sqrt(var + eps))                       # EUP slot

    # Pass 2: gather the permuted (group-local) stats, mix with lambda, and
    # apply the single FMA re-style.  samp_num is small and static, so the
    # gather is an unrolled indicator-weighted sum (no dynamic vector gather).
    for b in range(samp_num):
        src = perm_ref[base + b] - base                        # local src in [0, samp_num)
        lam = lmda_ref[base + b]                               # f32 scalar
        mu_s = jnp.zeros_like(mus[0])
        sig_s = jnp.zeros_like(sigs[0])
        for j in range(samp_num):
            w = (src == j).astype(jnp.float32)
            mu_s = mu_s + w * mus[j]
            sig_s = sig_s + w * sigs[j]
        mu_mix = lam * mus[b] + (1.0 - lam) * mu_s
        sig_mix = lam * sigs[b] + (1.0 - lam) * sig_s
        # (x - mu)/sig * sig_mix + mu_mix  ==  x * scale + bias
        scale = sig_mix / sigs[b]                              # tiny (Cb, 1) divide
        bias = mu_mix - mus[b] * scale
        o_ref[b] = (x_ref[b].astype(jnp.float32) * scale + bias).astype(o_ref.dtype)


# ---------------------------------------------------------------------------
# Hot path (jit-compatible): one fused pallas_call.
# ---------------------------------------------------------------------------
@functools.partial(jax.jit, static_argnames=("eps", "samp_num"))
def mixstyle_apply(x, lmda, perm, *, eps=1e-6, samp_num=4):
    """Re-style x with MixStyle given lambda (B0,) and a group-local perm (B0,).

    `perm` must only permute indices within consecutive groups of `samp_num`
    batch rows (this is how the PyTorch module constructs it), so the permuted
    statistics needed by a block always live inside that block.
    """
    B0, C, H, W = x.shape
    assert B0 % samp_num == 0, "batch must be a multiple of samp_num"
    hw = H * W
    x3d = x.reshape(B0, C, hw)
    perm = jnp.asarray(perm, jnp.int32).reshape(B0)
    lmda = jnp.asarray(lmda, jnp.float32).reshape(B0)

    cb = _pick_channel_block(C, samp_num, hw, x.dtype.itemsize)
    grid = (B0 // samp_num, pl.cdiv(C, cb))

    kernel = functools.partial(_mixstyle_kernel, eps=eps, samp_num=samp_num)
    out3d = pl.pallas_call(
        kernel,
        out_shape=jax.ShapeDtypeStruct((B0, C, hw), x.dtype),
        grid_spec=pltpu.PrefetchScalarGridSpec(
            num_scalar_prefetch=2,
            grid=grid,
            in_specs=[
                pl.BlockSpec((samp_num, cb, hw), lambda g, c, perm, lmda: (g, c, 0)),
            ],
            out_specs=pl.BlockSpec((samp_num, cb, hw), lambda g, c, perm, lmda: (g, c, 0)),
        ),
        compiler_params=pltpu.CompilerParams(
            dimension_semantics=("parallel", "parallel"),
            vmem_limit_bytes=_VMEM_LIMIT_BYTES,
        ),
    )(perm, lmda, x3d)
    return out3d.reshape(B0, C, H, W)


# ---------------------------------------------------------------------------
# Module-like wrapper: sampling of lambda / permutation and the stochastic gate.
# ---------------------------------------------------------------------------
def _make_half_perm(key, half, samp_num):
    """Permutation of [0, half): shuffle within consecutive groups of samp_num
    (matches perm_a construction in the PyTorch module)."""
    ngroups = half // samp_num
    keys = jax.random.split(key, ngroups)
    parts = [g * samp_num + jax.random.permutation(keys[g], samp_num)
             for g in range(ngroups)]
    return jnp.concatenate(parts, axis=0).astype(jnp.int32)


def mixstyle_forward(x, x2, key, *, p=0.5, alpha=0.3, eps=1e-6, samp_num=4,
                     training=True, force_apply=False):
    """MixStyle forward matching the PyTorch module's returned tensor.

    The stochastic gate mirrors `random.random() > p` and is resolved on the
    HOST (do not jit this function; the jit-compatible hot path is
    `mixstyle_apply`).  x2 only feeds the discarded second half of the output,
    so it is never read on the hot path.
    """
    if not training:
        return x
    key_gate, key_lmda, key_perm = jax.random.split(key, 3)
    if not force_apply:
        # TODO(synk): host-resolved stochastic gate forces a device sync by design.
        if float(jax.random.uniform(key_gate, ())) > p:
            return x

    B0 = x.shape[0]
    assert B0 % samp_num == 0, "half-batch must be a multiple of samp_num"
    lmda = jax.random.beta(key_lmda, alpha, alpha, shape=(B0,), dtype=jnp.float32)
    perm = _make_half_perm(key_perm, B0, samp_num)
    return mixstyle_apply(x, lmda, perm, eps=eps, samp_num=samp_num)


# ---------------------------------------------------------------------------
# Pure-JAX reference: literal port of the torch module (including the concat
# the kernel deliberately skips), used to validate the fused path.
# ---------------------------------------------------------------------------
def _reference(x, x2, lmda_first, perm_first, eps):
    x_cat = jnp.concatenate((x, x2), axis=0)
    B = x_cat.shape[0]
    half = B // 2
    mu = jnp.mean(x_cat, axis=(2, 3), keepdims=True)
    var = jnp.var(x_cat, axis=(2, 3), keepdims=True, ddof=1)
    sig = jnp.sqrt(var + eps)
    x_normed = (x_cat - mu) / sig
    # second-half lambda / perm never affect the returned first half
    lmda = jnp.concatenate(
        [lmda_first.reshape(half), jnp.ones((half,), jnp.float32)]
    ).reshape(B, 1, 1, 1)
    perm = jnp.concatenate([perm_first.astype(jnp.int32),
                            jnp.arange(half, B, dtype=jnp.int32)])
    mu_mix = mu * lmda + mu[perm] * (1.0 - lmda)
    sig_mix = sig * lmda + sig[perm] * (1.0 - lmda)
    x_out = x_normed * sig_mix + mu_mix
    return x_out[:half]


if __name__ == "__main__":
    p, alpha, eps, samp_num = 0.5, 0.3, 1e-6, 4

    def run_case(key, shape, dtype, tol):
        B0 = shape[0]
        kx, kx2, kl, kp = jax.random.split(key, 4)
        x = jax.random.normal(kx, shape, jnp.float32).astype(dtype)
        x2 = jax.random.normal(kx2, shape, jnp.float32).astype(dtype)
        lmda = jax.random.beta(kl, alpha, alpha, shape=(B0,), dtype=jnp.float32)
        perm = _make_half_perm(kp, B0, samp_num)

        out = mixstyle_apply(x, lmda, perm, eps=eps, samp_num=samp_num)
        out = jax.block_until_ready(out)
        assert out.shape == shape and out.dtype == dtype, (out.shape, out.dtype)

        ref = _reference(x.astype(jnp.float32), x2.astype(jnp.float32),
                         lmda, perm, eps)
        err = float(jnp.max(jnp.abs(out.astype(jnp.float32) - ref)))
        assert err < tol, (shape, str(dtype), err)

    # samp_num=4 requires the half-batch to be a multiple of 4.
    run_case(jax.random.PRNGKey(0), (4, 4, 16, 16), jnp.float32, 1e-4)    # base case
    run_case(jax.random.PRNGKey(1), (8, 16, 16, 16), jnp.float32, 1e-4)   # 2 batch groups
    run_case(jax.random.PRNGKey(2), (4, 16, 16, 16), jnp.bfloat16, 6e-2)  # bf16 I/O

    # Exercise the full module-like wrapper once (deterministic apply).
    kx, kx2 = jax.random.split(jax.random.PRNGKey(3))
    x = jax.random.normal(kx, (4, 4, 16, 16), jnp.float32)
    x2 = jax.random.normal(kx2, (4, 4, 16, 16), jnp.float32)
    out2 = mixstyle_forward(x, x2, jax.random.PRNGKey(4), p=p, alpha=alpha,
                            eps=eps, samp_num=samp_num, training=True,
                            force_apply=True)
    out2 = jax.block_until_ready(out2)
    assert out2.shape == x.shape

    print("KERNEL_OK")
</pallas_src>

<mosaic_0001>
module attributes {stable_mosaic.version = 11 : i64} {
  func.func @_mixstyle_kernel(%arg0: i32, %arg1: i32, %arg2: memref<4xi32, #tpu.memory_space<smem>>, %arg3: memref<4xf32, #tpu.memory_space<smem>>, %arg4: memref<4x4x256xf32, #tpu.memory_space<vmem>>, %arg5: memref<4x4x256xf32, #tpu.memory_space<vmem>>) attributes {dimension_semantics = [#tpu.dimension_semantics<parallel>, #tpu.dimension_semantics<parallel>], iteration_bounds = array<i64: 1, 1>, scalar_prefetch = 2 : i64, scratch_operands = 0 : i64, tpu.core_type = #tpu.core_type<tc>, window_params = [{transform_indices = @transform_0, window_bounds = array<i64: 4, 4, 256>}, {transform_indices = @transform_1, window_bounds = array<i64: 4, 4, 256>}]} {
    %c4_i32 = arith.constant 4 : i32
    %0 = arith.muli %arg0, %c4_i32 : i32
    %c0 = arith.constant 0 : index
    %c0_0 = arith.constant 0 : index
    %c0_1 = arith.constant 0 : index
    %1 = vector.load %arg4[%c0, %c0_0, %c0_1] : memref<4x4x256xf32, #tpu.memory_space<vmem>>, vector<1x4x256xf32>
    %2 = vector.shape_cast %1 : vector<1x4x256xf32> to vector<4x256xf32>
    %cst = arith.constant dense<0.000000e+00> : vector<4xf32>
    %3 = vector.multi_reduction <add>, %2, %cst [1] : vector<4x256xf32> to vector<4xf32>
    %4 = vector.shape_cast %3 : vector<4xf32> to vector<4x1xf32>
    %cst_2 = arith.constant 3.906250e-03 : f32
    %5 = vector.broadcast %cst_2 : f32 to vector<4x1xf32>
    %6 = arith.mulf %4, %5 : vector<4x1xf32>
    %7 = vector.broadcast %6 : vector<4x1xf32> to vector<4x256xf32>
    %8 = arith.subf %2, %7 : vector<4x256xf32>
    %9 = arith.mulf %8, %8 : vector<4x256xf32>
    %cst_3 = arith.constant dense<0.000000e+00> : vector<4xf32>
    %10 = vector.multi_reduction <add>, %9, %cst_3 [1] : vector<4x256xf32> to vector<4xf32>
    %11 = vector.shape_cast %10 : vector<4xf32> to vector<4x1xf32>
    %cst_4 = arith.constant 0.00392156886 : f32
    %12 = vector.broadcast %cst_4 : f32 to vector<4x1xf32>
    %13 = arith.mulf %11, %12 : vector<4x1xf32>
    %cst_5 = arith.constant 9.99999997E-7 : f32
    %14 = vector.broadcast %cst_5 : f32 to vector<4x1xf32>
    %15 = arith.addf %13, %14 : vector<4x1xf32>
    %16 = math.sqrt %15 : vector<4x1xf32>
    %c1 = arith.constant 1 : index
    %c0_6 = arith.constant 0 : index
    %c0_7 = arith.constant 0 : index
    %17 = vector.load %arg4[%c1, %c0_6, %c0_7] : memref<4x4x256xf32, #tpu.memory_space<vmem>>, vector<1x4x256xf32>
    %18 = vector.shape_cast %17 : vector<1x4x256xf32> to vector<4x256xf32>
    %cst_8 = arith.constant dense<0.000000e+00> : vector<4xf32>
    %19 = vector.multi_reduction <add>, %18, %cst_8 [1] : vector<4x256xf32> to vector<4xf32>
    %20 = vector.shape_cast %19 : vector<4xf32> to vector<4x1xf32>
    %cst_9 = arith.constant 3.906250e-03 : f32
    %21 = vector.broadcast %cst_9 : f32 to vector<4x1xf32>
    %22 = arith.mulf %20, %21 : vector<4x1xf32>
    %23 = vector.broadcast %22 : vector<4x1xf32> to vector<4x256xf32>
    %24 = arith.subf %18, %23 : vector<4x256xf32>
    %25 = arith.mulf %24, %24 : vector<4x256xf32>
    %cst_10 = arith.constant dense<0.000000e+00> : vector<4xf32>
    %26 = vector.multi_reduction <add>, %25, %cst_10 [1] : vector<4x256xf32> to vector<4xf32>
    %27 = vector.shape_cast %26 : vector<4xf32> to vector<4x1xf32>
    %cst_11 = arith.constant 0.00392156886 : f32
    %28 = vector.broadcast %cst_11 : f32 to vector<4x1xf32>
    %29 = arith.mulf %27, %28 : vector<4x1xf32>
    %cst_12 = arith.constant 9.99999997E-7 : f32
    %30 = vector.broadcast %cst_12 : f32 to vector<4x1xf32>
    %31 = arith.addf %29, %30 : vector<4x1xf32>
    %32 = math.sqrt %31 : vector<4x1xf32>
    %c2 = arith.constant 2 : index
    %c0_13 = arith.constant 0 : index
    %c0_14 = arith.constant 0 : index
    %33 = vector.load %arg4[%c2, %c0_13, %c0_14] : memref<4x4x256xf32, #tpu.memory_space<vmem>>, vector<1x4x256xf32>
    %34 = vector.shape_cast %33 : vector<1x4x256xf32> to vector<4x256xf32>
    %cst_15 = arith.constant dense<0.000000e+00> : vector<4xf32>
    %35 = vector.multi_reduction <add>, %34, %cst_15 [1] : vector<4x256xf32> to vector<4xf32>
    %36 = vector.shape_cast %35 : vector<4xf32> to vector<4x1xf32>
    %cst_16 = arith.constant 3.906250e-03 : f32
    %37 = vector.broadcast %cst_16 : f32 to vector<4x1xf32>
    %38 = arith.mulf %36, %37 : vector<4x1xf32>
    %39 = vector.broadcast %38 : vector<4x1xf32> to vector<4x256xf32>
    %40 = arith.subf %34, %39 : vector<4x256xf32>
    %41 = arith.mulf %40, %40 : vector<4x256xf32>
    %cst_17 = arith.constant dense<0.000000e+00> : vector<4xf32>
    %42 = vector.multi_reduction <add>, %41, %cst_17 [1] : vector<4x256xf32> to vector<4xf32>
    %43 = vector.shape_cast %42 : vector<4xf32> to vector<4x1xf32>
    %cst_18 = arith.constant 0.00392156886 : f32
    %44 = vector.broadcast %cst_18 : f32 to vector<4x1xf32>
    %45 = arith.mulf %43, %44 : vector<4x1xf32>
    %cst_19 = arith.constant 9.99999997E-7 : f32
    %46 = vector.broadcast %cst_19 : f32 to vector<4x1xf32>
    %47 = arith.addf %45, %46 : vector<4x1xf32>
    %48 = math.sqrt %47 : vector<4x1xf32>
    %c3 = arith.constant 3 : index
    %c0_20 = arith.constant 0 : index
    %c0_21 = arith.constant 0 : index
    %49 = vector.load %arg4[%c3, %c0_20, %c0_21] : memref<4x4x256xf32, #tpu.memory_space<vmem>>, vector<1x4x256xf32>
    %50 = vector.shape_cast %49 : vector<1x4x256xf32> to vector<4x256xf32>
    %cst_22 = arith.constant dense<0.000000e+00> : vector<4xf32>
    %51 = vector.multi_reduction <add>, %50, %cst_22 [1] : vector<4x256xf32> to vector<4xf32>
    %52 = vector.shape_cast %51 : vector<4xf32> to vector<4x1xf32>
    %cst_23 = arith.constant 3.906250e-03 : f32
    %53 = vector.broadcast %cst_23 : f32 to vector<4x1xf32>
    %54 = arith.mulf %52, %53 : vector<4x1xf32>
    %55 = vector.broadcast %54 : vector<4x1xf32> to vector<4x256xf32>
    %56 = arith.subf %50, %55 : vector<4x256xf32>
    %57 = arith.mulf %56, %56 : vector<4x256xf32>
    %cst_24 = arith.constant dense<0.000000e+00> : vector<4xf32>
    %58 = vector.multi_reduction <add>, %57, %cst_24 [1] : vector<4x256xf32> to vector<4xf32>
    %59 = vector.shape_cast %58 : vector<4xf32> to vector<4x1xf32>
    %cst_25 = arith.constant 0.00392156886 : f32
    %60 = vector.broadcast %cst_25 : f32 to vector<4x1xf32>
    %61 = arith.mulf %59, %60 : vector<4x1xf32>
    %cst_26 = arith.constant 9.99999997E-7 : f32
    %62 = vector.broadcast %cst_26 : f32 to vector<4x1xf32>
    %63 = arith.addf %61, %62 : vector<4x1xf32>
    %64 = math.sqrt %63 : vector<4x1xf32>
    %c0_i32 = arith.constant 0 : i32
    %65 = arith.addi %0, %c0_i32 : i32
    %66 = arith.index_cast %65 : i32 to index
    %67 = memref.load %arg2[%66] : memref<4xi32, #tpu.memory_space<smem>>
    %68 = arith.subi %67, %0 : i32
    %c0_i32_27 = arith.constant 0 : i32
    %69 = arith.addi %0, %c0_i32_27 : i32
    %70 = arith.index_cast %69 : i32 to index
    %71 = memref.load %arg3[%70] : memref<4xf32, #tpu.memory_space<smem>>
    %cst_28 = arith.constant 0.000000e+00 : f32
    %72 = vector.broadcast %cst_28 : f32 to vector<4x1xf32>
    %cst_29 = arith.constant 0.000000e+00 : f32
    %73 = vector.broadcast %cst_29 : f32 to vector<4x1xf32>
    %c0_i32_30 = arith.constant 0 : i32
    %74 = arith.cmpi eq, %68, %c0_i32_30 : i32
    %75 = arith.extui %74 : i1 to i32
    %76 = arith.sitofp %75 : i32 to f32
    %77 = vector.broadcast %76 : f32 to vector<4x1xf32>
    %78 = arith.mulf %77, %6 : vector<4x1xf32>
    %79 = arith.addf %72, %78 : vector<4x1xf32>
    %80 = vector.broadcast %76 : f32 to vector<4x1xf32>
    %81 = arith.mulf %80, %16 : vector<4x1xf32>
    %82 = arith.addf %73, %81 : vector<4x1xf32>
    %c1_i32 = arith.constant 1 : i32
    %83 = arith.cmpi eq, %68, %c1_i32 : i32
    %84 = arith.extui %83 : i1 to i32
    %85 = arith.sitofp %84 : i32 to f32
    %86 = vector.broadcast %85 : f32 to vector<4x1xf32>
    %87 = arith.mulf %86, %22 : vector<4x1xf32>
    %88 = arith.addf %79, %87 : vector<4x1xf32>
    %89 = vector.broadcast %85 : f32 to vector<4x1xf32>
    %90 = arith.mulf %89, %32 : vector<4x1xf32>
    %91 = arith.addf %82, %90 : vector<4x1xf32>
    %c2_i32 = arith.constant 2 : i32
    %92 = arith.cmpi eq, %68, %c2_i32 : i32
    %93 = arith.extui %92 : i1 to i32
    %94 = arith.sitofp %93 : i32 to f32
    %95 = vector.broadcast %94 : f32 to vector<4x1xf32>
    %96 = arith.mulf %95, %38 : vector<4x1xf32>
    %97 = arith.addf %88, %96 : vector<4x1xf32>
    %98 = vector.broadcast %94 : f32 to vector<4x1xf32>
    %99 = arith.mulf %98, %48 : vector<4x1xf32>
    %100 = arith.addf %91, %99 : vector<4x1xf32>
    %c3_i32 = arith.constant 3 : i32
    %101 = arith.cmpi eq, %68, %c3_i32 : i32
    %102 = arith.extui %101 : i1 to i32
    %103 = arith.sitofp %102 : i32 to f32
    %104 = vector.broadcast %103 : f32 to vector<4x1xf32>
    %105 = arith.mulf %104, %54 : vector<4x1xf32>
    %106 = arith.addf %97, %105 : vector<4x1xf32>
    %107 = vector.broadcast %103 : f32 to vector<4x1xf32>
    %108 = arith.mulf %107, %64 : vector<4x1xf32>
    %109 = arith.addf %100, %108 : vector<4x1xf32>
    %110 = vector.broadcast %71 : f32 to vector<4x1xf32>
    %111 = arith.mulf %110, %6 : vector<4x1xf32>
    %cst_31 = arith.constant 1.000000e+00 : f32
    %112 = arith.subf %cst_31, %71 : f32
    %113 = vector.broadcast %112 : f32 to vector<4x1xf32>
    %114 = arith.mulf %113, %106 : vector<4x1xf32>
    %115 = arith.addf %111, %114 : vector<4x1xf32>
    %116 = vector.broadcast %71 : f32 to vector<4x1xf32>
    %117 = arith.mulf %116, %16 : vector<4x1xf32>
    %cst_32 = arith.constant 1.000000e+00 : f32
    %118 = arith.subf %cst_32, %71 : f32
    %119 = vector.broadcast %118 : f32 to vector<4x1xf32>
    %120 = arith.mulf %119, %109 : vector<4x1xf32>
    %121 = arith.addf %117, %120 : vector<4x1xf32>
    %122 = arith.divf %121, %16 : vector<4x1xf32>
    %123 = arith.mulf %6, %122 : vector<4x1xf32>
    %124 = arith.subf %115, %123 : vector<4x1xf32>
    %c0_33 = arith.constant 0 : index
    %c0_34 = arith.constant 0 : index
    %c0_35 = arith.constant 0 : index
    %125 = vector.load %arg4[%c0_33, %c0_34, %c0_35] : memref<4x4x256xf32, #tpu.memory_space<vmem>>, vector<1x4x256xf32>
    %126 = vector.shape_cast %125 : vector<1x4x256xf32> to vector<4x256xf32>
    %127 = vector.broadcast %122 : vector<4x1xf32> to vector<4x256xf32>
    %128 = arith.mulf %126, %127 : vector<4x256xf32>
    %129 = vector.broadcast %124 : vector<4x1xf32> to vector<4x256xf32>
    %130 = arith.addf %128, %129 : vector<4x256xf32>
    %c0_36 = arith.constant 0 : index
    %c0_37 = arith.constant 0 : index
    %c0_38 = arith.constant 0 : index
    %131 = vector.load %arg5[%c0_36, %c0_37, %c0_38] : memref<4x4x256xf32, #tpu.memory_space<vmem>>, vector<1x4x256xf32>
    %132 = vector.shape_cast %131 : vector<1x4x256xf32> to vector<4x256xf32>
    %133 = vector.shape_cast %130 : vector<4x256xf32> to vector<1x4x256xf32>
    tpu.vector_store %arg5[%c0_36, %c0_37, %c0_38], %133 {strides = array<i32>} : memref<4x4x256xf32, #tpu.memory_space<vmem>>, vector<1x4x256xf32>,
    %c1_i32_39 = arith.constant 1 : i32
    %134 = arith.addi %0, %c1_i32_39 : i32
    %135 = arith.index_cast %134 : i32 to index
    %136 = memref.load %arg2[%135] : memref<4xi32, #tpu.memory_space<smem>>
    %137 = arith.subi %136, %0 : i32
    %c1_i32_40 = arith.constant 1 : i32
    %138 = arith.addi %0, %c1_i32_40 : i32
    %139 = arith.index_cast %138 : i32 to index
    %140 = memref.load %arg3[%139] : memref<4xf32, #tpu.memory_space<smem>>
    %cst_41 = arith.constant 0.000000e+00 : f32
    %141 = vector.broadcast %cst_41 : f32 to vector<4x1xf32>
    %cst_42 = arith.constant 0.000000e+00 : f32
    %142 = vector.broadcast %cst_42 : f32 to vector<4x1xf32>
    %c0_i32_43 = arith.constant 0 : i32
    %143 = arith.cmpi eq, %137, %c0_i32_43 : i32
    %144 = arith.extui %143 : i1 to i32
    %145 = arith.sitofp %144 : i32 to f32
    %146 = vector.broadcast %145 : f32 to vector<4x1xf32>
    %147 = arith.mulf %146, %6 : vector<4x1xf32>
    %148 = arith.addf %141, %147 : vector<4x1xf32>
    %149 = vector.broadcast %145 : f32 to vector<4x1xf32>
    %150 = arith.mulf %149, %16 : vector<4x1xf32>
    %151 = arith.addf %142, %150 : vector<4x1xf32>
    %c1_i32_44 = arith.constant 1 : i32
    %152 = arith.cmpi eq, %137, %c1_i32_44 : i32
    %153 = arith.extui %152 : i1 to i32
    %154 = arith.sitofp %153 : i32 to f32
    %155 = vector.broadcast %154 : f32 to vector<4x1xf32>
    %156 = arith.mulf %155, %22 : vector<4x1xf32>
    %157 = arith.addf %148, %156 : vector<4x1xf32>
    %158 = vector.broadcast %154 : f32 to vector<4x1xf32>
    %159 = arith.mulf %158, %32 : vector<4x1xf32>
    %160 = arith.addf %151, %159 : vector<4x1xf32>
    %c2_i32_45 = arith.constant 2 : i32
    %161 = arith.cmpi eq, %137, %c2_i32_45 : i32
    %162 = arith.extui %161 : i1 to i32
    %163 = arith.sitofp %162 : i32 to f32
    %164 = vector.broadcast %163 : f32 to vector<4x1xf32>
    %165 = arith.mulf %164, %38 : vector<4x1xf32>
    %166 = arith.addf %157, %165 : vector<4x1xf32>
    %167 = vector.broadcast %163 : f32 to vector<4x1xf32>
    %168 = arith.mulf %167, %48 : vector<4x1xf32>
    %169 = arith.addf %160, %168 : vector<4x1xf32>
    %c3_i32_46 = arith.constant 3 : i32
    %170 = arith.cmpi eq, %137, %c3_i32_46 : i32
    %171 = arith.extui %170 : i1 to i32
    %172 = arith.sitofp %171 : i32 to f32
    %173 = vector.broadcast %172 : f32 to vector<4x1xf32>
    %174 = arith.mulf %173, %54 : vector<4x1xf32>
    %175 = arith.addf %166, %174 : vector<4x1xf32>
    %176 = vector.broadcast %172 : f32 to vector<4x1xf32>
    %177 = arith.mulf %176, %64 : vector<4x1xf32>
    %178 = arith.addf %169, %177 : vector<4x1xf32>
    %179 = vector.broadcast %140 : f32 to vector<4x1xf32>
    %180 = arith.mulf %179, %22 : vector<4x1xf32>
    %cst_47 = arith.constant 1.000000e+00 : f32
    %181 = arith.subf %cst_47, %140 : f32
    %182 = vector.broadcast %181 : f32 to vector<4x1xf32>
    %183 = arith.mulf %182, %175 : vector<4x1xf32>
    %184 = arith.addf %180, %183 : vector<4x1xf32>
    %185 = vector.broadcast %140 : f32 to vector<4x1xf32>
    %186 = arith.mulf %185, %32 : vector<4x1xf32>
    %cst_48 = arith.constant 1.000000e+00 : f32
    %187 = arith.subf %cst_48, %140 : f32
    %188 = vector.broadcast %187 : f32 to vector<4x1xf32>
    %189 = arith.mulf %188, %178 : vector<4x1xf32>
    %190 = arith.addf %186, %189 : vector<4x1xf32>
    %191 = arith.divf %190, %32 : vector<4x1xf32>
    %192 = arith.mulf %22, %191 : vector<4x1xf32>
    %193 = arith.subf %184, %192 : vector<4x1xf32>
    %c1_49 = arith.constant 1 : index
    %c0_50 = arith.constant 0 : index
    %c0_51 = arith.constant 0 : index
    %194 = vector.load %arg4[%c1_49, %c0_50, %c0_51] : memref<4x4x256xf32, #tpu.memory_space<vmem>>, vector<1x4x256xf32>
    %195 = vector.shape_cast %194 : vector<1x4x256xf32> to vector<4x256xf32>
    %196 = vector.broadcast %191 : vector<4x1xf32> to vector<4x256xf32>
    %197 = arith.mulf %195, %196 : vector<4x256xf32>
    %198 = vector.broadcast %193 : vector<4x1xf32> to vector<4x256xf32>
    %199 = arith.addf %197, %198 : vector<4x256xf32>
    %c1_52 = arith.constant 1 : index
    %c0_53 = arith.constant 0 : index
    %c0_54 = arith.constant 0 : index
    %200 = vector.load %arg5[%c1_52, %c0_53, %c0_54] : memref<4x4x256xf32, #tpu.memory_space<vmem>>, vector<1x4x256xf32>
    %201 = vector.shape_cast %200 : vector<1x4x256xf32> to vector<4x256xf32>
    %202 = vector.shape_cast %199 : vector<4x256xf32> to vector<1x4x256xf32>
    tpu.vector_store %arg5[%c1_52, %c0_53, %c0_54], %202 {strides = array<i32>} : memref<4x4x256xf32, #tpu.memory_space<vmem>>, vector<1x4x256xf32>,
    %c2_i32_55 = arith.constant 2 : i32
    %203 = arith.addi %0, %c2_i32_55 : i32
    %204 = arith.index_cast %203 : i32 to index
    %205 = memref.load %arg2[%204] : memref<4xi32, #tpu.memory_space<smem>>
    %206 = arith.subi %205, %0 : i32
    %c2_i32_56 = arith.constant 2 : i32
    %207 = arith.addi %0, %c2_i32_56 : i32
    %208 = arith.index_cast %207 : i32 to index
    %209 = memref.load %arg3[%208] : memref<4xf32, #tpu.memory_space<smem>>
    %cst_57 = arith.constant 0.000000e+00 : f32
    %210 = vector.broadcast %cst_57 : f32 to vector<4x1xf32>
    %cst_58 = arith.constant 0.000000e+00 : f32
    %211 = vector.broadcast %cst_58 : f32 to vector<4x1xf32>
    %c0_i32_59 = arith.constant 0 : i32
    %212 = arith.cmpi eq, %206, %c0_i32_59 : i32
    %213 = arith.extui %212 : i1 to i32
    %214 = arith.sitofp %213 : i32 to f32
    %215 = vector.broadcast %214 : f32 to vector<4x1xf32>
    %216 = arith.mulf %215, %6 : vector<4x1xf32>
    %217 = arith.addf %210, %216 : vector<4x1xf32>
    %218 = vector.broadcast %214 : f32 to vector<4x1xf32>
    %219 = arith.mulf %218, %16 : vector<4x1xf32>
    %220 = arith.addf %211, %219 : vector<4x1xf32>
    %c1_i32_60 = arith.constant 1 : i32
    %221 = arith.cmpi eq, %206, %c1_i32_60 : i32
    %222 = arith.extui %221 : i1 to i32
    %223 = arith.sitofp %222 : i32 to f32
    %224 = vector.broadcast %223 : f32 to vector<4x1xf32>
    %225 = arith.mulf %224, %22 : vector<4x1xf32>
    %226 = arith.addf %217, %225 : vector<4x1xf32>
    %227 = vector.broadcast %223 : f32 to vector<4x1xf32>
    %228 = arith.mulf %227, %32 : vector<4x1xf32>
    %229 = arith.addf %220, %228 : vector<4x1xf32>
    %c2_i32_61 = arith.constant 2 : i32
    %230 = arith.cmpi eq, %206, %c2_i32_61 : i32
    %231 = arith.extui %230 : i1 to i32
    %232 = arith.sitofp %231 : i32 to f32
    %233 = vector.broadcast %232 : f32 to vector<4x1xf32>
    %234 = arith.mulf %233, %38 : vector<4x1xf32>
    %235 = arith.addf %226, %234 : vector<4x1xf32>
    %236 = vector.broadcast %232 : f32 to vector<4x1xf32>
    %237 = arith.mulf %236, %48 : vector<4x1xf32>
    %238 = arith.addf %229, %237 : vector<4x1xf32>
    %c3_i32_62 = arith.constant 3 : i32
    %239 = arith.cmpi eq, %206, %c3_i32_62 : i32
    %240 = arith.extui %239 : i1 to i32
    %241 = arith.sitofp %240 : i32 to f32
    %242 = vector.broadcast %241 : f32 to vector<4x1xf32>
    %243 = arith.mulf %242, %54 : vector<4x1xf32>
    %244 = arith.addf %235, %243 : vector<4x1xf32>
    %245 = vector.broadcast %241 : f32 to vector<4x1xf32>
    %246 = arith.mulf %245, %64 : vector<4x1xf32>
    %247 = arith.addf %238, %246 : vector<4x1xf32>
    %248 = vector.broadcast %209 : f32 to vector<4x1xf32>
    %249 = arith.mulf %248, %38 : vector<4x1xf32>
    %cst_63 = arith.constant 1.000000e+00 : f32
    %250 = arith.subf %cst_63, %209 : f32
    %251 = vector.broadcast %250 : f32 to vector<4x1xf32>
    %252 = arith.mulf %251, %244 : vector<4x1xf32>
    %253 = arith.addf %249, %252 : vector<4x1xf32>
    %254 = vector.broadcast %209 : f32 to vector<4x1xf32>
    %255 = arith.mulf %254, %48 : vector<4x1xf32>
    %cst_64 = arith.constant 1.000000e+00 : f32
    %256 = arith.subf %cst_64, %209 : f32
    %257 = vector.broadcast %256 : f32 to vector<4x1xf32>
    %258 = arith.mulf %257, %247 : vector<4x1xf32>
    %259 = arith.addf %255, %258 : vector<4x1xf32>
    %260 = arith.divf %259, %48 : vector<4x1xf32>
    %261 = arith.mulf %38, %260 : vector<4x1xf32>
    %262 = arith.subf %253, %261 : vector<4x1xf32>
    %c2_65 = arith.constant 2 : index
    %c0_66 = arith.constant 0 : index
    %c0_67 = arith.constant 0 : index
    %263 = vector.load %arg4[%c2_65, %c0_66, %c0_67] : memref<4x4x256xf32, #tpu.memory_space<vmem>>, vector<1x4x256xf32>
    %264 = vector.shape_cast %263 : vector<1x4x256xf32> to vector<4x256xf32>
    %265 = vector.broadcast %260 : vector<4x1xf32> to vector<4x256xf32>
    %266 = arith.mulf %264, %265 : vector<4x256xf32>
    %267 = vector.broadcast %262 : vector<4x1xf32> to vector<4x256xf32>
    %268 = arith.addf %266, %267 : vector<4x256xf32>
    %c2_68 = arith.constant 2 : index
    %c0_69 = arith.constant 0 : index
    %c0_70 = arith.constant 0 : index
    %269 = vector.load %arg5[%c2_68, %c0_69, %c0_70] : memref<4x4x256xf32, #tpu.memory_space<vmem>>, vector<1x4x256xf32>
    %270 = vector.shape_cast %269 : vector<1x4x256xf32> to vector<4x256xf32>
    %271 = vector.shape_cast %268 : vector<4x256xf32> to vector<1x4x256xf32>
    tpu.vector_store %arg5[%c2_68, %c0_69, %c0_70], %271 {strides = array<i32>} : memref<4x4x256xf32, #tpu.memory_space<vmem>>, vector<1x4x256xf32>,
    %c3_i32_71 = arith.constant 3 : i32
    %272 = arith.addi %0, %c3_i32_71 : i32
    %273 = arith.index_cast %272 : i32 to index
    %274 = memref.load %arg2[%273] : memref<4xi32, #tpu.memory_space<smem>>
    %275 = arith.subi %274, %0 : i32
    %c3_i32_72 = arith.constant 3 : i32
    %276 = arith.addi %0, %c3_i32_72 : i32
    %277 = arith.index_cast %276 : i32 to index
    %278 = memref.load %arg3[%277] : memref<4xf32, #tpu.memory_space<smem>>
    %cst_73 = arith.constant 0.000000e+00 : f32
    %279 = vector.broadcast %cst_73 : f32 to vector<4x1xf32>
    %cst_74 = arith.constant 0.000000e+00 : f32
    %280 = vector.broadcast %cst_74 : f32 to vector<4x1xf32>
    %c0_i32_75 = arith.constant 0 : i32
    %281 = arith.cmpi eq, %275, %c0_i32_75 : i32
    %282 = arith.extui %281 : i1 to i32
    %283 = arith.sitofp %282 : i32 to f32
    %284 = vector.broadcast %283 : f32 to vector<4x1xf32>
    %285 = arith.mulf %284, %6 : vector<4x1xf32>
    %286 = arith.addf %279, %285 : vector<4x1xf32>
    %287 = vector.broadcast %283 : f32 to vector<4x1xf32>
    %288 = arith.mulf %287, %16 : vector<4x1xf32>
    %289 = arith.addf %280, %288 : vector<4x1xf32>
    %c1_i32_76 = arith.constant 1 : i32
    %290 = arith.cmpi eq, %275, %c1_i32_76 : i32
    %291 = arith.extui %290 : i1 to i32
    %292 = arith.sitofp %291 : i32 to f32
    %293 = vector.broadcast %292 : f32 to vector<4x1xf32>
    %294 = arith.mulf %293, %22 : vector<4x1xf32>
    %295 = arith.addf %286, %294 : vector<4x1xf32>
    %296 = vector.broadcast %292 : f32 to vector<4x1xf32>
    %297 = arith.mulf %296, %32 : vector<4x1xf32>
    %298 = arith.addf %289, %297 : vector<4x1xf32>
    %c2_i32_77 = arith.constant 2 : i32
    %299 = arith.cmpi eq, %275, %c2_i32_77 : i32
    %300 = arith.extui %299 : i1 to i32
    %301 = arith.sitofp %300 : i32 to f32
    %302 = vector.broadcast %301 : f32 to vector<4x1xf32>
    %303 = arith.mulf %302, %38 : vector<4x1xf32>
    %304 = arith.addf %295, %303 : vector<4x1xf32>
    %305 = vector.broadcast %301 : f32 to vector<4x1xf32>
    %306 = arith.mulf %305, %48 : vector<4x1xf32>
    %307 = arith.addf %298, %306 : vector<4x1xf32>
    %c3_i32_78 = arith.constant 3 : i32
    %308 = arith.cmpi eq, %275, %c3_i32_78 : i32
    %309 = arith.extui %308 : i1 to i32
    %310 = arith.sitofp %309 : i32 to f32
    %311 = vector.broadcast %310 : f32 to vector<4x1xf32>
    %312 = arith.mulf %311, %54 : vector<4x1xf32>
    %313 = arith.addf %304, %312 : vector<4x1xf32>
    %314 = vector.broadcast %310 : f32 to vector<4x1xf32>
    %315 = arith.mulf %314, %64 : vector<4x1xf32>
    %316 = arith.addf %307, %315 : vector<4x1xf32>
    %317 = vector.broadcast %278 : f32 to vector<4x1xf32>
    %318 = arith.mulf %317, %54 : vector<4x1xf32>
    %cst_79 = arith.constant 1.000000e+00 : f32
    %319 = arith.subf %cst_79, %278 : f32
    %320 = vector.broadcast %319 : f32 to vector<4x1xf32>
    %321 = arith.mulf %320, %313 : vector<4x1xf32>
    %322 = arith.addf %318, %321 : vector<4x1xf32>
    %323 = vector.broadcast %278 : f32 to vector<4x1xf32>
    %324 = arith.mulf %323, %64 : vector<4x1xf32>
    %cst_80 = arith.constant 1.000000e+00 : f32
    %325 = arith.subf %cst_80, %278 : f32
    %326 = vector.broadcast %325 : f32 to vector<4x1xf32>
    %327 = arith.mulf %326, %316 : vector<4x1xf32>
    %328 = arith.addf %324, %327 : vector<4x1xf32>
    %329 = arith.divf %328, %64 : vector<4x1xf32>
    %330 = arith.mulf %54, %329 : vector<4x1xf32>
    %331 = arith.subf %322, %330 : vector<4x1xf32>
    %c3_81 = arith.constant 3 : index
    %c0_82 = arith.constant 0 : index
    %c0_83 = arith.constant 0 : index
    %332 = vector.load %arg4[%c3_81, %c0_82, %c0_83] : memref<4x4x256xf32, #tpu.memory_space<vmem>>, vector<1x4x256xf32>
    %333 = vector.shape_cast %332 : vector<1x4x256xf32> to vector<4x256xf32>
    %334 = vector.broadcast %329 : vector<4x1xf32> to vector<4x256xf32>
    %335 = arith.mulf %333, %334 : vector<4x256xf32>
    %336 = vector.broadcast %331 : vector<4x1xf32> to vector<4x256xf32>
    %337 = arith.addf %335, %336 : vector<4x256xf32>
    %c3_84 = arith.constant 3 : index
    %c0_85 = arith.constant 0 : index
    %c0_86 = arith.constant 0 : index
    %338 = vector.load %arg5[%c3_84, %c0_85, %c0_86] : memref<4x4x256xf32, #tpu.memory_space<vmem>>, vector<1x4x256xf32>
    %339 = vector.shape_cast %338 : vector<1x4x256xf32> to vector<4x256xf32>
    %340 = vector.shape_cast %337 : vector<4x256xf32> to vector<1x4x256xf32>
    tpu.vector_store %arg5[%c3_84, %c0_85, %c0_86], %340 {strides = array<i32>} : memref<4x4x256xf32, #tpu.memory_space<vmem>>, vector<1x4x256xf32>,
    return
  }
  func.func @transform_0(%arg0: i32, %arg1: i32, %arg2: memref<4xi32, #tpu.memory_space<smem>>, %arg3: memref<4xf32, #tpu.memory_space<smem>>) -> (i32, i32, i32) {
    %c0_i32 = arith.constant 0 : i32
    %c0_i32_0 = arith.constant 0 : i32
    return %arg0, %arg1, %c0_i32 : i32, i32, i32
  }
  func.func @transform_1(%arg0: i32, %arg1: i32, %arg2: memref<4xi32, #tpu.memory_space<smem>>, %arg3: memref<4xf32, #tpu.memory_space<smem>>) -> (i32, i32, i32) {
    %c0_i32 = arith.constant 0 : i32
    %c0_i32_0 = arith.constant 0 : i32
    return %arg0, %arg1, %c0_i32 : i32, i32, i32
  }
}

</mosaic_0001>

<llo_original>
// kernel: mixstyle_apply.1
$region0: #{mixstyle_apply.1}
  #allocation0 [shape = 'u32[]', space=smem, size = 0x4, offset = 0x4, fixed_abs, tag = 'smem constant byte address 0x4 - core index']
  #allocation1 [shape = 'u32[72,128]{1,0:T(1,128)}', space=vmem, size = 0x9000, scoped, tag = 'internal scratch']
  #allocation2 [shape = 's32[1]{0}', space=sflag, size = 0x4, scoped, tag = 'scoped memory for mixstyle_apply.1']
  #allocation3 [shape = 'u8[512]{0}', space=smem, size = 0x200, scoped, tag = 'prefetched SMEM operand 0']
  #allocation4 [shape = 'u8[512]{0}', space=smem, size = 0x200, scoped, tag = 'prefetched SMEM operand 1']
  %s0 = inlined_call_operand.vmem [shape: s32[4], index: 0, kind: input, shape index: {}]
  %s1 = inlined_call_operand.vmem [shape: f32[4], index: 1, kind: input, shape index: {}]
  %s2 = inlined_call_operand.vmem [shape: f32[4,4,256], index: 2, kind: input, shape index: {}]
  %s3 = inlined_call_operand.vmem [shape: f32[4,4,256], index: 3, kind: output, shape index: {}]
  %s4 = sld [smem:[#allocation0]]
  $region14: #{mixstyle_apply.1} parent=0
    _
  %s6 = ssub.s32 1, %s4
  %s7 = scalar_select 0, %s6, %s4
  %s9 = sshll.u32 %s0, 4
  %s10 = int_to_ptr.vmem [resolvable:$true] %s9
  %12 = dma.vmem_to_smem %s10, 16, [#allocation3], [#allocation2]
  %s14 = sshll.u32 %s1, 4
  %s15 = int_to_ptr.vmem [resolvable:$true] %s14
  %17 = dma.vmem_to_smem %s15, 16, [#allocation4], [#allocation2]
  %19 = dma.done [#allocation2], 32
  %20 = sfence
  // Predicated region
  $region2: #{mixstyle_apply.1} parent=0 // pred_check
    _
  $region3: #{mixstyle_apply.1} parent=0 // pred_check_branch
    %22 = sbr.rel (0) target = $region5
  $region4: #{mixstyle_apply.1} parent=0 // pred_region
    _
  $region5: #{mixstyle_apply.1} parent=0 // pred_fallthru
    _
  %s23 = smul.u32 0, 4
  %v24 = vld [vmem:[%s2] sm:$0xff]
  %26 = vst [vmem:[#allocation1] ss:$2 sm:$0xff] %v24
  %v27 = vld.sshfl [vmem:[#allocation1] sm:$0xff pattern:$0x75316420]
  %v28 = vld.sshfl [vmem:[#allocation1 + $0x8] sm:$0xff pattern:$0x75316420]
  %vm31 = vcmask 1043456
  %v32 = vsel %vm31, %v27, 0.0
  %v33 = vsel %vm31, %v28, 0.0
  %v34 = vadd.f32 %v32, %v33
  %35 = vadd.xlane.f32.xlu0 %v34
  %v36 = vpop.xlane.xlu0 %35
  %v37 = vmul.f32 %v36, 0.00390625
  %v40 = vunpack.c.l.s4 839922192
  %v41 = vunpack.c.0.s8 %v40
  %v42 = vperm.slane %v37, %v41
  %v44 = vsub.f32 %v24, %v42
  %v45 = vmul.f32 %v44, %v44
  %47 = vst [vmem:[#allocation1] ss:$2 sm:$0xff] %v45
  %v48 = vld.sshfl [vmem:[#allocation1] sm:$0xff pattern:$0x75316420]
  %v49 = vld.sshfl [vmem:[#allocation1 + $0x8] sm:$0xff pattern:$0x75316420]
  %v52 = vsel %vm31, %v48, 0.0
  %v53 = vsel %vm31, %v49, 0.0
  %v54 = vadd.f32 %v52, %v53
  %55 = vadd.xlane.f32.xlu0 %v54
  %v56 = vpop.xlane.xlu0 %55
  %v57 = vmul.f32 %v56, 0.003921569
  %v58 = vadd.f32 %v57, 1e-06
  %v59 = vrsqrt.pop %v58
  %v60 = vmul.f32 %v59, %v58
  %v61 = vmul.f32 %v60, %v59
  %v62 = vmul.f32 0.5, %v61
  %v63 = vsub.f32 1.5, %v62
  %v64 = vmul.f32 %v59, %v63
  %v65 = vmul.f32 %v58, %v64
  %vm66 = vcmp.eq.f32.partialorder %v58, inf
  %v67 = vsel %vm66, %v58, %v65
  %vm68 = vcmp.eq.f32.partialorder %v58, 0.0
  %v69 = vand.u32 %v58, 2147483648
  %v70 = vsel %vm68, %v69, %v67
  %s71 = scalar_lea.vmem %s2, 8
  %v72 = vld [vmem:[%s71] sm:$0xff]
  %74 = vst [vmem:[#allocation1] ss:$2 sm:$0xff] %v72
  %v75 = vld.sshfl [vmem:[#allocation1] sm:$0xff pattern:$0x75316420]
  %v76 = vld.sshfl [vmem:[#allocation1 + $0x8] sm:$0xff pattern:$0x75316420]
  %v79 = vsel %vm31, %v75, 0.0
  %v80 = vsel %vm31, %v76, 0.0
  %v81 = vadd.f32 %v79, %v80
  %82 = vadd.xlane.f32.xlu0 %v81
  %v83 = vpop.xlane.xlu0 %82
  %v84 = vmul.f32 %v83, 0.00390625
  %v87 = vunpack.c.l.s4 839922192
  %v88 = vunpack.c.0.s8 %v87
  %v89 = vperm.slane %v84, %v88
  %v91 = vsub.f32 %v72, %v89
  %v92 = vmul.f32 %v91, %v91
  %94 = vst [vmem:[#allocation1] ss:$2 sm:$0xff] %v92
  %v95 = vld.sshfl [vmem:[#allocation1] sm:$0xff pattern:$0x75316420]
  %v96 = vld.sshfl [vmem:[#allocation1 + $0x8] sm:$0xff pattern:$0x75316420]
  %v99 = vsel %vm31, %v95, 0.0
  %v100 = vsel %vm31, %v96, 0.0
  %v101 = vadd.f32 %v99, %v100
  %102 = vadd.xlane.f32.xlu0 %v101
  %v103 = vpop.xlane.xlu0 %102
  %v104 = vmul.f32 %v103, 0.003921569
  %v105 = vadd.f32 %v104, 1e-06
  %v106 = vrsqrt.pop %v105
  %v107 = vmul.f32 %v106, %v105
  %v108 = vmul.f32 %v107, %v106
  %v109 = vmul.f32 0.5, %v108
  %v110 = vsub.f32 1.5, %v109
  %v111 = vmul.f32 %v106, %v110
  %v112 = vmul.f32 %v105, %v111
  %vm113 = vcmp.eq.f32.partialorder %v105, inf
  %v114 = vsel %vm113, %v105, %v112
  %vm115 = vcmp.eq.f32.partialorder %v105, 0.0
  %v116 = vand.u32 %v105, 2147483648
  %v117 = vsel %vm115, %v116, %v114
  %s118 = scalar_lea.vmem %s2, 16
  %v119 = vld [vmem:[%s118] sm:$0xff]
  %121 = vst [vmem:[#allocation1] ss:$2 sm:$0xff] %v119
  %v122 = vld.sshfl [vmem:[#allocation1] sm:$0xff pattern:$0x75316420]
  %v123 = vld.sshfl [vmem:[#allocation1 + $0x8] sm:$0xff pattern:$0x75316420]
  %v126 = vsel %vm31, %v122, 0.0
  %v127 = vsel %vm31, %v123, 0.0
  %v128 = vadd.f32 %v126, %v127
  %129 = vadd.xlane.f32.xlu0 %v128
  %v130 = vpop.xlane.xlu0 %129
  %v131 = vmul.f32 %v130, 0.00390625
  %v134 = vunpack.c.l.s4 839922192
  %v135 = vunpack.c.0.s8 %v134
  %v136 = vperm.slane %v131, %v135
  %v138 = vsub.f32 %v119, %v136
  %v139 = vmul.f32 %v138, %v138
  %141 = vst [vmem:[#allocation1] ss:$2 sm:$0xff] %v139
  %v142 = vld.sshfl [vmem:[#allocation1] sm:$0xff pattern:$0x75316420]
  %v143 = vld.sshfl [vmem:[#allocation1 + $0x8] sm:$0xff pattern:$0x75316420]
  %v146 = vsel %vm31, %v142, 0.0
  %v147 = vsel %vm31, %v143, 0.0
  %v148 = vadd.f32 %v146, %v147
  %149 = vadd.xlane.f32.xlu0 %v148
  %v150 = vpop.xlane.xlu0 %149
  %v151 = vmul.f32 %v150, 0.003921569
  %v152 = vadd.f32 %v151, 1e-06
  %v153 = vrsqrt.pop %v152
  %v154 = vmul.f32 %v153, %v152
  %v155 = vmul.f32 %v154, %v153
  %v156 = vmul.f32 0.5, %v155
  %v157 = vsub.f32 1.5, %v156
  %v158 = vmul.f32 %v153, %v157
  %v159 = vmul.f32 %v152, %v158
  %vm160 = vcmp.eq.f32.partialorder %v152, inf
  %v161 = vsel %vm160, %v152, %v159
  %vm162 = vcmp.eq.f32.partialorder %v152, 0.0
  %v163 = vand.u32 %v152, 2147483648
  %v164 = vsel %vm162, %v163, %v161
  %s165 = scalar_lea.vmem %s2, 24
  %v166 = vld [vmem:[%s165] sm:$0xff]
  %168 = vst [vmem:[#allocation1] ss:$2 sm:$0xff] %v166
  %v169 = vld.sshfl [vmem:[#allocation1] sm:$0xff pattern:$0x75316420]
  %v170 = vld.sshfl [vmem:[#allocation1 + $0x8] sm:$0xff pattern:$0x75316420]
  %v173 = vsel %vm31, %v169, 0.0
  %v174 = vsel %vm31, %v170, 0.0
  %v175 = vadd.f32 %v173, %v174
  %176 = vadd.xlane.f32.xlu0 %v175
  %v177 = vpop.xlane.xlu0 %176
  %v178 = vmul.f32 %v177, 0.00390625
  %v181 = vunpack.c.l.s4 839922192
  %v182 = vunpack.c.0.s8 %v181
  %v183 = vperm.slane %v178, %v182
  %v185 = vsub.f32 %v166, %v183
  %v186 = vmul.f32 %v185, %v185
  %188 = vst [vmem:[#allocation1] ss:$2 sm:$0xff] %v186
  %v189 = vld.sshfl [vmem:[#allocation1] sm:$0xff pattern:$0x75316420]
  %v190 = vld.sshfl [vmem:[#allocation1 + $0x8] sm:$0xff pattern:$0x75316420]
  %v193 = vsel %vm31, %v189, 0.0
  %v194 = vsel %vm31, %v190, 0.0
  %v195 = vadd.f32 %v193, %v194
  %196 = vadd.xlane.f32.xlu0 %v195
  %v197 = vpop.xlane.xlu0 %196
  %v198 = vmul.f32 %v197, 0.003921569
  %v199 = vadd.f32 %v198, 1e-06
  %v200 = vrsqrt.pop %v199
  %v201 = vmul.f32 %v200, %v199
  %v202 = vmul.f32 %v201, %v200
  %v203 = vmul.f32 0.5, %v202
  %v204 = vsub.f32 1.5, %v203
  %v205 = vmul.f32 %v200, %v204
  %v206 = vmul.f32 %v199, %v205
  %vm207 = vcmp.eq.f32.partialorder %v199, inf
  %v208 = vsel %vm207, %v199, %v206
  %vm209 = vcmp.eq.f32.partialorder %v199, 0.0
  %v210 = vand.u32 %v199, 2147483648
  %v211 = vsel %vm209, %v210, %v208
  %s212 = sld [smem:[#allocation3 + %s23]]
  %s213 = ssub.s32 %s212, %s23
  %s214 = sld [smem:[#allocation4 + %s23]]
  %p215 = scmp.eq.s32.totalorder %s213, 0
  %s216 = scalar_select %p215, 1, 0
  %s217 = scvt.s32.f32 %s216
  %v218 = vstv %s217
  %v219 = vmul.f32 %v218, %v37
  %v220 = vadd.f32 %v219, 0.0
  %v221 = vmul.f32 %v218, %v70
  %v222 = vadd.f32 %v221, 0.0
  %p223 = scmp.eq.s32.totalorder %s213, 1
  %s224 = scalar_select %p223, 1, 0
  %s225 = scvt.s32.f32 %s224
  %v226 = vstv %s225
  %v227 = vmul.f32 %v226, %v84
  %v228 = vadd.f32 %v220, %v227
  %v229 = vmul.f32 %v226, %v117
  %v230 = vadd.f32 %v222, %v229
  %p231 = scmp.eq.s32.totalorder %s213, 2
  %s232 = scalar_select %p231, 1, 0
  %s233 = scvt.s32.f32 %s232
  %v234 = vstv %s233
  %v235 = vmul.f32 %v234, %v131
  %v236 = vadd.f32 %v228, %v235
  %v237 = vmul.f32 %v234, %v164
  %v238 = vadd.f32 %v230, %v237
  %p239 = scmp.eq.s32.totalorder %s213, 3
  %s240 = scalar_select %p239, 1, 0
  %s241 = scvt.s32.f32 %s240
  %v242 = vstv %s241
  %v243 = vmul.f32 %v242, %v178
  %v244 = vadd.f32 %v236, %v243
  %v245 = vmul.f32 %v242, %v211
  %v246 = vadd.f32 %v238, %v245
  %v247 = vstv %s214
  %v248 = vmul.f32 %v247, %v37
  %s249 = ssub.f32 1.0, %s214
  %v250 = vstv %s249
  %v251 = vmul.f32 %v250, %v244
  %v252 = vadd.f32 %v248, %v251
  %v253 = vmul.f32 %v247, %v70
  %v254 = vmul.f32 %v250, %v246
  %v255 = vadd.f32 %v253, %v254
  %v256 = vrcp.pop %v70
  %v257 = vmul.f32 %v70, %v256
  %v258 = vsub.f32 1.0, %v257
  %v259 = vmul.f32 %v256, %v258
  %v260 = vadd.f32 %v256, %v259
  %vm261 = vweird.f32 %v70
  %vm262 = vweird.f32 %v256
  %vm263 = vmor %vm261, %vm262
  %v264 = vsel %vm263, %v256, %v260
  %v265 = vand.u32 2147483647, %v70
  %vm266 = vcmp.eq.f32.partialorder %v265, 8.507059e+37
  %v267 = vand.u32 %v70, 2147483648
  %v268 = vor.u32 1.1754944e-38, %v267
  %v269 = vsel %vm266, %v268, %v264
  %v270 = vmul.f32 %v255, %v269
  %v271 = vmul.f32 %v37, %v270
  %v272 = vsub.f32 %v252, %v271
  %v275 = vunpack.c.l.s4 839922192
  %v276 = vunpack.c.0.s8 %v275
  %v277 = vperm.slane %v270, %v276
  %v279 = vmul.f32 %v24, %v277
  %v282 = vunpack.c.l.s4 839922192
  %v283 = vunpack.c.0.s8 %v282
  %v284 = vperm.slane %v272, %v283
  %v286 = vadd.f32 %v279, %v284
  %287 = vst [vmem:[%s3] sm:$0xff] %v286
  %s288 = sadd.s32 %s23, 1
  %s289 = sld [smem:[#allocation3 + %s288]]
  %s290 = ssub.s32 %s289, %s23
  %s291 = sld [smem:[#allocation4 + %s288]]
  %p292 = scmp.eq.s32.totalorder %s290, 0
  %s293 = scalar_select %p292, 1, 0
  %s294 = scvt.s32.f32 %s293
  %v295 = vstv %s294
  %v296 = vmul.f32 %v295, %v37
  %v297 = vadd.f32 %v296, 0.0
  %v298 = vmul.f32 %v295, %v70
  %v299 = vadd.f32 %v298, 0.0
  %p300 = scmp.eq.s32.totalorder %s290, 1
  %s301 = scalar_select %p300, 1, 0
  %s302 = scvt.s32.f32 %s301
  %v303 = vstv %s302
  %v304 = vmul.f32 %v303, %v84
  %v305 = vadd.f32 %v297, %v304
  %v306 = vmul.f32 %v303, %v117
  %v307 = vadd.f32 %v299, %v306
  %p308 = scmp.eq.s32.totalorder %s290, 2
  %s309 = scalar_select %p308, 1, 0
  %s310 = scvt.s32.f32 %s309
  %v311 = vstv %s310
  %v312 = vmul.f32 %v311, %v131
  %v313 = vadd.f32 %v305, %v312
  %v314 = vmul.f32 %v311, %v164
  %v315 = vadd.f32 %v307, %v314
  %p316 = scmp.eq.s32.totalorder %s290, 3
  %s317 = scalar_select %p316, 1, 0
  %s318 = scvt.s32.f32 %s317
  %v319 = vstv %s318
  %v320 = vmul.f32 %v319, %v178
  %v321 = vadd.f32 %v313, %v320
  %v322 = vmul.f32 %v319, %v211
  %v323 = vadd.f32 %v315, %v322
  %v324 = vstv %s291
  %v325 = vmul.f32 %v324, %v84
  %s326 = ssub.f32 1.0, %s291
  %v327 = vstv %s326
  %v328 = vmul.f32 %v327, %v321
  %v329 = vadd.f32 %v325, %v328
  %v330 = vmul.f32 %v324, %v117
  %v331 = vmul.f32 %v327, %v323
  %v332 = vadd.f32 %v330, %v331
  %v333 = vrcp.pop %v117
  %v334 = vmul.f32 %v117, %v333
  %v335 = vsub.f32 1.0, %v334
  %v336 = vmul.f32 %v333, %v335
  %v337 = vadd.f32 %v333, %v336
  %vm338 = vweird.f32 %v117
  %vm339 = vweird.f32 %v333
  %vm340 = vmor %vm338, %vm339
  %v341 = vsel %vm340, %v333, %v337
  %v342 = vand.u32 2147483647, %v117
  %vm343 = vcmp.eq.f32.partialorder %v342, 8.507059e+37
  %v344 = vand.u32 %v117, 2147483648
  %v345 = vor.u32 1.1754944e-38, %v344
  %v346 = vsel %vm343, %v345, %v341
  %v347 = vmul.f32 %v332, %v346
  %v348 = vmul.f32 %v84, %v347
  %v349 = vsub.f32 %v329, %v348
  %v350 = vld [vmem:[%s71] sm:$0xff]
  %v353 = vunpack.c.l.s4 839922192
  %v354 = vunpack.c.0.s8 %v353
  %v355 = vperm.slane %v347, %v354
  %v357 = vmul.f32 %v350, %v355
  %v360 = vunpack.c.l.s4 839922192
  %v361 = vunpack.c.0.s8 %v360
  %v362 = vperm.slane %v349, %v361
  %v364 = vadd.f32 %v357, %v362
  %s365 = scalar_lea.vmem %s3, 8
  %366 = vst [vmem:[%s365] sm:$0xff] %v364
  %s367 = sadd.s32 %s23, 2
  %s368 = sld [smem:[#allocation3 + %s367]]
  %s369 = ssub.s32 %s368, %s23
  %s370 = sld [smem:[#allocation4 + %s367]]
  %p371 = scmp.eq.s32.totalorder %s369, 0
  %s372 = scalar_select %p371, 1, 0
  %s373 = scvt.s32.f32 %s372
  %v374 = vstv %s373
  %v375 = vmul.f32 %v374, %v37
  %v376 = vadd.f32 %v375, 0.0
  %v377 = vmul.f32 %v374, %v70
  %v378 = vadd.f32 %v377, 0.0
  %p379 = scmp.eq.s32.totalorder %s369, 1
  %s380 = scalar_select %p379, 1, 0
  %s381 = scvt.s32.f32 %s380
  %v382 = vstv %s381
  %v383 = vmul.f32 %v382, %v84
  %v384 = vadd.f32 %v376, %v383
  %v385 = vmul.f32 %v382, %v117
  %v386 = vadd.f32 %v378, %v385
  %p387 = scmp.eq.s32.totalorder %s369, 2
  %s388 = scalar_select %p387, 1, 0
  %s389 = scvt.s32.f32 %s388
  %v390 = vstv %s389
  %v391 = vmul.f32 %v390, %v131
  %v392 = vadd.f32 %v384, %v391
  %v393 = vmul.f32 %v390, %v164
  %v394 = vadd.f32 %v386, %v393
  %p395 = scmp.eq.s32.totalorder %s369, 3
  %s396 = scalar_select %p395, 1, 0
  %s397 = scvt.s32.f32 %s396
  %v398 = vstv %s397
  %v399 = vmul.f32 %v398, %v178
  %v400 = vadd.f32 %v392, %v399
  %v401 = vmul.f32 %v398, %v211
  %v402 = vadd.f32 %v394, %v401
  %v403 = vstv %s370
  %v404 = vmul.f32 %v403, %v131
  %s405 = ssub.f32 1.0, %s370
  %v406 = vstv %s405
  %v407 = vmul.f32 %v406, %v400
  %v408 = vadd.f32 %v404, %v407
  %v409 = vmul.f32 %v403, %v164
  %v410 = vmul.f32 %v406, %v402
  %v411 = vadd.f32 %v409, %v410
  %v412 = vrcp.pop %v164
  %v413 = vmul.f32 %v164, %v412
  %v414 = vsub.f32 1.0, %v413
  %v415 = vmul.f32 %v412, %v414
  %v416 = vadd.f32 %v412, %v415
  %vm417 = vweird.f32 %v164
  %vm418 = vweird.f32 %v412
  %vm419 = vmor %vm417, %vm418
  %v420 = vsel %vm419, %v412, %v416
  %v421 = vand.u32 2147483647, %v164
  %vm422 = vcmp.eq.f32.partialorder %v421, 8.507059e+37
  %v423 = vand.u32 %v164, 2147483648
  %v424 = vor.u32 1.1754944e-38, %v423
  %v425 = vsel %vm422, %v424, %v420
  %v426 = vmul.f32 %v411, %v425
  %v427 = vmul.f32 %v131, %v426
  %v428 = vsub.f32 %v408, %v427
  %v429 = vld [vmem:[%s118] sm:$0xff]
  %v432 = vunpack.c.l.s4 839922192
  %v433 = vunpack.c.0.s8 %v432
  %v434 = vperm.slane %v426, %v433
  %v436 = vmul.f32 %v429, %v434
  %v439 = vunpack.c.l.s4 839922192
  %v440 = vunpack.c.0.s8 %v439
  %v441 = vperm.slane %v428, %v440
  %v443 = vadd.f32 %v436, %v441
  %s444 = scalar_lea.vmem %s3, 16
  %445 = vst [vmem:[%s444] sm:$0xff] %v443
  %s446 = sadd.s32 %s23, 3
  %s447 = sld [smem:[#allocation3 + %s446]]
  %s448 = ssub.s32 %s447, %s23
  %s449 = sld [smem:[#allocation4 + %s446]]
  %p450 = scmp.eq.s32.totalorder %s448, 0
  %s451 = scalar_select %p450, 1, 0
  %s452 = scvt.s32.f32 %s451
  %v453 = vstv %s452
  %v454 = vmul.f32 %v453, %v37
  %v455 = vadd.f32 %v454, 0.0
  %v456 = vmul.f32 %v453, %v70
  %v457 = vadd.f32 %v456, 0.0
  %p458 = scmp.eq.s32.totalorder %s448, 1
  %s459 = scalar_select %p458, 1, 0
  %s460 = scvt.s32.f32 %s459
  %v461 = vstv %s460
  %v462 = vmul.f32 %v461, %v84
  %v463 = vadd.f32 %v455, %v462
  %v464 = vmul.f32 %v461, %v117
  %v465 = vadd.f32 %v457, %v464
  %p466 = scmp.eq.s32.totalorder %s448, 2
  %s467 = scalar_select %p466, 1, 0
  %s468 = scvt.s32.f32 %s467
  %v469 = vstv %s468
  %v470 = vmul.f32 %v469, %v131
  %v471 = vadd.f32 %v463, %v470
  %v472 = vmul.f32 %v469, %v164
  %v473 = vadd.f32 %v465, %v472
  %p474 = scmp.eq.s32.totalorder %s448, 3
  %s475 = scalar_select %p474, 1, 0
  %s476 = scvt.s32.f32 %s475
  %v477 = vstv %s476
  %v478 = vmul.f32 %v477, %v178
  %v479 = vadd.f32 %v471, %v478
  %v480 = vmul.f32 %v477, %v211
  %v481 = vadd.f32 %v473, %v480
  %v482 = vstv %s449
  %v483 = vmul.f32 %v482, %v178
  %s484 = ssub.f32 1.0, %s449
  %v485 = vstv %s484
  %v486 = vmul.f32 %v485, %v479
  %v487 = vadd.f32 %v483, %v486
  %v488 = vmul.f32 %v482, %v211
  %v489 = vmul.f32 %v485, %v481
  %v490 = vadd.f32 %v488, %v489
  %v491 = vrcp.pop %v211
  %v492 = vmul.f32 %v211, %v491
  %v493 = vsub.f32 1.0, %v492
  %v494 = vmul.f32 %v491, %v493
  %v495 = vadd.f32 %v491, %v494
  %vm496 = vweird.f32 %v211
  %vm497 = vweird.f32 %v491
  %vm498 = vmor %vm496, %vm497
  %v499 = vsel %vm498, %v491, %v495
  %v500 = vand.u32 2147483647, %v211
  %vm501 = vcmp.eq.f32.partialorder %v500, 8.507059e+37
  %v502 = vand.u32 %v211, 2147483648
  %v503 = vor.u32 1.1754944e-38, %v502
  %v504 = vsel %vm501, %v503, %v499
  %v505 = vmul.f32 %v490, %v504
  %v506 = vmul.f32 %v178, %v505
  %v507 = vsub.f32 %v487, %v506
  %v508 = vld [vmem:[%s165] sm:$0xff]
  %v511 = vunpack.c.l.s4 839922192
  %v512 = vunpack.c.0.s8 %v511
  %v513 = vperm.slane %v505, %v512
  %v515 = vmul.f32 %v508, %v513
  %v518 = vunpack.c.l.s4 839922192
  %v519 = vunpack.c.0.s8 %v518
  %v520 = vperm.slane %v507, %v519
  %v522 = vadd.f32 %v515, %v520
  %s523 = scalar_lea.vmem %s3, 24
  %524 = vst [vmem:[%s523] sm:$0xff] %v522
  // Predicated region
  $region6: #{mixstyle_apply.1} parent=0 // pred_check
    _
  $region7: #{mixstyle_apply.1} parent=0 // pred_check_branch
    %526 = sbr.rel (0) target = $region9
  $region8: #{mixstyle_apply.1} parent=0 // pred_region
    _
  $region9: #{mixstyle_apply.1} parent=0 // pred_fallthru
    _
  // Predicated region
  $region10: #{mixstyle_apply.1} parent=0 // pred_check
    _
  $region11: #{mixstyle_apply.1} parent=0 // pred_check_branch
    %528 = sbr.rel (0) target = $region13
  $region12: #{mixstyle_apply.1} parent=0 // pred_region
    _
  $region13: #{mixstyle_apply.1} parent=0 // pred_fallthru
    _

</llo_original>
